<compile_context>
chip_gen: v7x
topology: tpu7x:2x2x1
jax: 0.10.0
libtpu: 0.0.40
codegen_flags: <defaults>
</compile_context>

<pallas_src>
import jax
import jax.numpy as jnp
from jax import lax
from jax.experimental import pallas as pl
from jax.experimental.pallas import tpu as pltpu

_LANE = 128
_DEFAULT_MAX_BLOCK_ROWS = 4096   # (4096,128) f32 = 2 MiB per pipeline buffer.
_NUM_SHARDS = 2                  # leading "parallel" grid axis (v7x dual-TC).
_VMEM_LIMIT_BYTES = 48 * 1024 * 1024  # safe on v5e/v6e (128 MiB) and v7x (64 MiB).


def _make_kernel(rows, block_rows, steps_total, steps_per_shard,
                 need_row_mask, has_duplicate_steps):
    last = steps_total - 1

    def kernel(p_ref, l_ref, ae_out, cnt_out):
        i = pl.program_id(1)
        g = pl.program_id(0) * steps_per_shard + i   # global step index

        @pl.when(i == 0)
        def _init():
            ae_out[...] = jnp.zeros_like(ae_out)
            cnt_out[...] = jnp.zeros_like(cnt_out)

        def accumulate(apply_row_mask):
            p = p_ref[...].astype(jnp.float32)
            l = l_ref[...].astype(jnp.float32)
            valid = jnp.logical_not(jnp.isnan(l))
            if apply_row_mask:
                # Only the global last block hangs past `rows`; gate its
                # padded rows out by global row index.
                # NOTE: int32 row index only overflows past ~2^31 rows.
                row_idx = g * block_rows + lax.broadcasted_iota(
                    jnp.int32, (block_rows, _LANE), 0)
                valid = jnp.logical_and(valid, row_idx < rows)
            ae = jnp.abs(p - l)
            # torch: NaN losses (NaN preds at valid labels, inf-inf, ...)
            # become 0 in the numerator but still count in the denominator.
            contrib = jnp.where(
                jnp.logical_and(valid, jnp.logical_not(jnp.isnan(ae))),
                ae, 0.0)
            # Sublane-axis partial sums only; the single cross-lane reduction
            # happens in the wrapper on the (num_shards, 1, 128) partials.
            ae_out[...] += jnp.sum(
                contrib, axis=0, keepdims=True).reshape(1, 1, _LANE)
            cnt_out[...] += jnp.sum(
                valid.astype(jnp.float32), axis=0,
                keepdims=True).reshape(1, 1, _LANE)

        if need_row_mask:
            # Fast path for every step but the global last one.
            @pl.when(g < last)
            def _fast():
                accumulate(False)

            @pl.when(g == last)
            def _masked():
                accumulate(True)
        elif has_duplicate_steps:
            # Shards may carry a few trailing duplicate (clamped) steps when
            # steps_total doesn't split evenly; skip their contribution.
            @pl.when(g <= last)
            def _guarded():
                accumulate(False)
        else:
            accumulate(False)

    return kernel


def masked_mae(preds, labels, *, max_block_rows=_DEFAULT_MAX_BLOCK_ROWS):
    """Pallas implementation of MaskedMAE.forward(preds, labels)."""
    assert preds.shape == labels.shape
    n = preds.size
    pf = preds.reshape(-1)
    lf = labels.reshape(-1)

    rows = n // _LANE
    tail = n - rows * _LANE

    # <128-element flat tail handled in plain JAX (avoids a full-array pad
    # copy of both inputs just to reach the next lane multiple).
    if tail:
        tp = pf[rows * _LANE:].astype(jnp.float32)
        tl = lf[rows * _LANE:].astype(jnp.float32)
        tvalid = jnp.logical_not(jnp.isnan(tl))
        tae = jnp.abs(tp - tl)
        tcontrib = jnp.where(
            jnp.logical_and(tvalid, jnp.logical_not(jnp.isnan(tae))),
            tae, jnp.float32(0.0))
        tail_sum = jnp.sum(tcontrib)
        tail_cnt = jnp.sum(tvalid.astype(jnp.float32))
    else:
        tail_sum = jnp.float32(0.0)
        tail_cnt = jnp.float32(0.0)

    if rows == 0:
        # Entire input is smaller than one lane row; pure-JAX path.
        return jnp.where(tail_cnt > 0.0, tail_sum / tail_cnt, jnp.float32(0.0))

    # Lane-dense (rows, 128) views of the main body. When n % 128 == 0 the
    # slice is a no-op and the reshape is a pure bitcast.
    pm = pf[: rows * _LANE].reshape(rows, _LANE)
    lm = lf[: rows * _LANE].reshape(rows, _LANE)

    if rows <= max_block_rows:
        block_rows = rows  # full-dim block: always a legal tile
    else:
        # Multiple of 32: sublane-tile safe for f32 (8), bf16 (16), int8 (32).
        block_rows = max(32, (max_block_rows // 32) * 32)
    steps_total = pl.cdiv(rows, block_rows)
    need_row_mask = (rows % block_rows) != 0

    num_shards = _NUM_SHARDS if steps_total >= _NUM_SHARDS else 1
    steps_per_shard = pl.cdiv(steps_total, num_shards)
    has_duplicate_steps = (steps_per_shard * num_shards) != steps_total

    kernel = _make_kernel(rows, block_rows, steps_total, steps_per_shard,
                          need_row_mask, has_duplicate_steps)

    def in_map(s, i):
        # Clamp so a shard's trailing duplicate steps never index past the
        # last block (their contribution is skipped inside the kernel).
        return (jnp.minimum(s * steps_per_shard + i, steps_total - 1), 0)

    part_shape = jax.ShapeDtypeStruct((num_shards, 1, _LANE), jnp.float32)
    in_bytes = (pm.size * pm.dtype.itemsize) + (lm.size * lm.dtype.itemsize)
    out_bytes = 2 * num_shards * _LANE * 4

    ae_parts, cnt_parts = pl.pallas_call(
        kernel,
        out_shape=(part_shape, part_shape),
        grid_spec=pltpu.PrefetchScalarGridSpec(
            num_scalar_prefetch=0,
            grid=(num_shards, steps_per_shard),
            in_specs=[
                pl.BlockSpec((block_rows, _LANE), in_map),
                pl.BlockSpec((block_rows, _LANE), in_map),
            ],
            out_specs=(
                pl.BlockSpec((1, 1, _LANE), lambda s, i: (s, 0, 0)),
                pl.BlockSpec((1, 1, _LANE), lambda s, i: (s, 0, 0)),
            ),
        ),
        compiler_params=pltpu.CompilerParams(
            dimension_semantics=("parallel", "arbitrary"),
            vmem_limit_bytes=_VMEM_LIMIT_BYTES),
        cost_estimate=pl.CostEstimate(
            flops=8 * n, transcendentals=0,
            bytes_accessed=in_bytes + out_bytes),
    )(pm, lm)

    # Tiny final combine: cross-lane sums of the per-shard partials + flat
    # tail, then the masked-mean division (0.0 when no valid labels).
    # NOTE: f32 count/sum accumulation loses exactness only beyond ~2e9
    # valid elements per lane-shard; acceptable for metric evaluation.
    total = jnp.sum(ae_parts) + tail_sum
    cnt = jnp.sum(cnt_parts) + tail_cnt
    return jnp.where(cnt > 0.0, total / cnt, jnp.float32(0.0))


def _masked_mae_ref(preds, labels):
    # Pure-JAX transliteration of the PyTorch module, for verification.
    mask = jnp.logical_not(jnp.isnan(labels)).astype(jnp.float32)
    mask = mask / jnp.mean(mask)
    mask = jnp.where(jnp.isnan(mask), jnp.zeros_like(mask), mask)
    loss = jnp.abs(preds - labels)
    loss = loss * mask
    loss = jnp.where(jnp.isnan(loss), jnp.zeros_like(loss), loss)
    return jnp.mean(loss)


if __name__ == "__main__":
    key = jax.random.PRNGKey(0)
    kp, kl, km = jax.random.split(key, 3)

    # Test 1: small NCHW tensor, ~25% missing labels (single block, 1 shard).
    B, C, H, W = 2, 4, 16, 16
    preds = jax.random.normal(kp, (B, C, H, W), dtype=jnp.float32)
    labels = jax.random.normal(kl, (B, C, H, W), dtype=jnp.float32)
    labels = jnp.where(jax.random.uniform(km, (B, C, H, W)) < 0.25,
                       jnp.nan, labels)
    r1 = masked_mae(preds, labels)
    jax.block_until_ready(r1)
    ref1 = _masked_mae_ref(preds, labels)
    assert jnp.allclose(r1, ref1, rtol=1e-4, atol=1e-6), (r1, ref1)

    # Test 2: size not divisible by 128 -> 64-element flat tail, multi-shard
    # grid with a partial last block (tail-row masking on the last step only).
    kp2, kl2, km2 = jax.random.split(jax.random.PRNGKey(1), 3)
    shape2 = (2, 3, 40, 100)
    preds2 = jax.random.normal(kp2, shape2, dtype=jnp.float32)
    labels2 = jax.random.normal(kl2, shape2, dtype=jnp.float32)
    labels2 = jnp.where(jax.random.uniform(km2, shape2) < 0.3, jnp.nan, labels2)
    r2 = masked_mae(preds2, labels2, max_block_rows=48)
    jax.block_until_ready(r2)
    ref2 = _masked_mae_ref(preds2, labels2)
    assert jnp.allclose(r2, ref2, rtol=1e-4, atol=1e-6), (r2, ref2)

    # Test 3: all labels NaN -> result must be exactly 0.
    preds3 = jax.random.normal(kp2, (1, 1, 8, 16), dtype=jnp.float32)
    labels3 = jnp.full((1, 1, 8, 16), jnp.nan, dtype=jnp.float32)
    r3 = masked_mae(preds3, labels3)
    jax.block_until_ready(r3)
    assert jnp.allclose(r3, 0.0), r3

    # Test 4: odd step count -> one shard carries a clamped duplicate step
    # that must be skipped; also partial last block.
    kp4, kl4, km4 = jax.random.split(jax.random.PRNGKey(2), 3)
    shape4 = (2, 75, 128)
    preds4 = jax.random.normal(kp4, shape4, dtype=jnp.float32)
    labels4 = jax.random.normal(kl4, shape4, dtype=jnp.float32)
    labels4 = jnp.where(jax.random.uniform(km4, shape4) < 0.3, jnp.nan, labels4)
    r4 = masked_mae(preds4, labels4, max_block_rows=48)
    jax.block_until_ready(r4)
    ref4 = _masked_mae_ref(preds4, labels4)
    assert jnp.allclose(r4, ref4, rtol=1e-4, atol=1e-6), (r4, ref4)

    # Test 5: bf16 inputs stream natively (half the HBM bytes), f32 accumulate.
    kp5, kl5, km5 = jax.random.split(jax.random.PRNGKey(3), 3)
    shape5 = (4, 8, 64)
    preds5 = jax.random.normal(kp5, shape5, dtype=jnp.float32).astype(jnp.bfloat16)
    labels5 = jax.random.normal(kl5, shape5, dtype=jnp.float32).astype(jnp.bfloat16)
    labels5 = jnp.where(jax.random.uniform(km5, shape5) < 0.2,
                        jnp.bfloat16(jnp.nan), labels5)
    r5 = masked_mae(preds5, labels5)
    jax.block_until_ready(r5)
    ref5 = _masked_mae_ref(preds5.astype(jnp.float32), labels5.astype(jnp.float32))
    assert jnp.allclose(r5, ref5, rtol=1e-3, atol=1e-5), (r5, ref5)

    # Test 6: tiny input (< 128 elements) -> pure-JAX tail path.
    kp6, kl6, km6 = jax.random.split(jax.random.PRNGKey(4), 3)
    preds6 = jax.random.normal(kp6, (3, 20), dtype=jnp.float32)
    labels6 = jax.random.normal(kl6, (3, 20), dtype=jnp.float32)
    labels6 = jnp.where(jax.random.uniform(km6, (3, 20)) < 0.3, jnp.nan, labels6)
    r6 = masked_mae(preds6, labels6)
    jax.block_until_ready(r6)
    ref6 = _masked_mae_ref(preds6, labels6)
    assert jnp.allclose(r6, ref6, rtol=1e-4, atol=1e-6), (r6, ref6)

    print("KERNEL_OK")
</pallas_src>

<mosaic_0001>
module attributes {stable_mosaic.version = 11 : i64} {
  func.func @kernel(%arg0: i32, %arg1: i32, %arg2: memref<16x128xf32, #tpu.memory_space<vmem>>, %arg3: memref<16x128xf32, #tpu.memory_space<vmem>>, %arg4: memref<1x1x128xf32, #tpu.memory_space<vmem>>, %arg5: memref<1x1x128xf32, #tpu.memory_space<vmem>>) attributes {dimension_semantics = [#tpu.dimension_semantics<parallel>, #tpu.dimension_semantics<arbitrary>], iteration_bounds = array<i64: 1, 1>, scalar_prefetch = 0 : i64, scratch_operands = 0 : i64, tpu.core_type = #tpu.core_type<tc>, window_params = [{transform_indices = @transform_0, window_bounds = array<i64: 16, 128>}, {transform_indices = @transform_1, window_bounds = array<i64: 16, 128>}, {transform_indices = @transform_2, window_bounds = array<i64: 1, 1, 128>}, {transform_indices = @transform_3, window_bounds = array<i64: 1, 1, 128>}]} {
    %c0_i32 = arith.constant 0 : i32
    %0 = arith.cmpi eq, %arg1, %c0_i32 : i32
    %1 = arith.extui %0 : i1 to i32
    %c0_i32_0 = arith.constant 0 : i32
    %2 = arith.cmpi ne, %1, %c0_i32_0 : i32
    scf.if %2 {
      %cst_20 = arith.constant 0.000000e+00 : f32
      %28 = vector.broadcast %cst_20 : f32 to vector<1x1x128xf32>
      %c0_21 = arith.constant 0 : index
      %c0_22 = arith.constant 0 : index
      %c0_23 = arith.constant 0 : index
      %29 = vector.load %arg4[%c0_21, %c0_22, %c0_23] : memref<1x1x128xf32, #tpu.memory_space<vmem>>, vector<1x1x128xf32>
      tpu.vector_store %arg4[%c0_21, %c0_22, %c0_23], %28 {strides = array<i32>} : memref<1x1x128xf32, #tpu.memory_space<vmem>>, vector<1x1x128xf32>,
      %cst_24 = arith.constant 0.000000e+00 : f32
      %30 = vector.broadcast %cst_24 : f32 to vector<1x1x128xf32>
      %c0_25 = arith.constant 0 : index
      %c0_26 = arith.constant 0 : index
      %c0_27 = arith.constant 0 : index
      %31 = vector.load %arg5[%c0_25, %c0_26, %c0_27] : memref<1x1x128xf32, #tpu.memory_space<vmem>>, vector<1x1x128xf32>
      tpu.vector_store %arg5[%c0_25, %c0_26, %c0_27], %30 {strides = array<i32>} : memref<1x1x128xf32, #tpu.memory_space<vmem>>, vector<1x1x128xf32>,
    } else {
    }
    %c0 = arith.constant 0 : index
    %c0_1 = arith.constant 0 : index
    %3 = vector.load %arg2[%c0, %c0_1] : memref<16x128xf32, #tpu.memory_space<vmem>>, vector<16x128xf32>
    %c0_2 = arith.constant 0 : index
    %c0_3 = arith.constant 0 : index
    %4 = vector.load %arg3[%c0_2, %c0_3] : memref<16x128xf32, #tpu.memory_space<vmem>>, vector<16x128xf32>
    %5 = arith.cmpf one, %4, %4 : vector<16x128xf32>
    %cst = arith.constant dense<true> : vector<16x128xi1>
    %6 = arith.xori %5, %cst : vector<16x128xi1>
    %7 = arith.subf %3, %4 : vector<16x128xf32>
    %8 = math.absf %7 : vector<16x128xf32>
    %9 = arith.cmpf one, %8, %8 : vector<16x128xf32>
    %cst_4 = arith.constant dense<true> : vector<16x128xi1>
    %10 = arith.xori %9, %cst_4 : vector<16x128xi1>
    %11 = arith.andi %6, %10 : vector<16x128xi1>
    %cst_5 = arith.constant 0.000000e+00 : f32
    %12 = vector.broadcast %cst_5 : f32 to vector<16x128xf32>
    %13 = arith.select %11, %8, %12 : vector<16x128xi1>, vector<16x128xf32>
    %c0_6 = arith.constant 0 : index
    %c0_7 = arith.constant 0 : index
    %c0_8 = arith.constant 0 : index
    %14 = vector.load %arg4[%c0_6, %c0_7, %c0_8] : memref<1x1x128xf32, #tpu.memory_space<vmem>>, vector<1x1x128xf32>
    %cst_9 = arith.constant dense<0.000000e+00> : vector<128xf32>
    %15 = vector.multi_reduction <add>, %13, %cst_9 [0] : vector<16x128xf32> to vector<128xf32>
    %16 = vector.shape_cast %15 : vector<128xf32> to vector<1x128xf32>
    %17 = vector.shape_cast %16 : vector<1x128xf32> to vector<1x1x128xf32>
    %18 = arith.addf %14, %17 : vector<1x1x128xf32>
    %c0_10 = arith.constant 0 : index
    %c0_11 = arith.constant 0 : index
    %c0_12 = arith.constant 0 : index
    %19 = vector.load %arg4[%c0_10, %c0_11, %c0_12] : memref<1x1x128xf32, #tpu.memory_space<vmem>>, vector<1x1x128xf32>
    tpu.vector_store %arg4[%c0_10, %c0_11, %c0_12], %18 {strides = array<i32>} : memref<1x1x128xf32, #tpu.memory_space<vmem>>, vector<1x1x128xf32>,
    %c0_13 = arith.constant 0 : index
    %c0_14 = arith.constant 0 : index
    %c0_15 = arith.constant 0 : index
    %20 = vector.load %arg5[%c0_13, %c0_14, %c0_15] : memref<1x1x128xf32, #tpu.memory_space<vmem>>, vector<1x1x128xf32>
    %21 = arith.extui %6 : vector<16x128xi1> to vector<16x128xi32>
    %22 = arith.sitofp %21 : vector<16x128xi32> to vector<16x128xf32>
    %cst_16 = arith.constant dense<0.000000e+00> : vector<128xf32>
    %23 = vector.multi_reduction <add>, %22, %cst_16 [0] : vector<16x128xf32> to vector<128xf32>
    %24 = vector.shape_cast %23 : vector<128xf32> to vector<1x128xf32>
    %25 = vector.shape_cast %24 : vector<1x128xf32> to vector<1x1x128xf32>
    %26 = arith.addf %20, %25 : vector<1x1x128xf32>
    %c0_17 = arith.constant 0 : index
    %c0_18 = arith.constant 0 : index
    %c0_19 = arith.constant 0 : index
    %27 = vector.load %arg5[%c0_17, %c0_18, %c0_19] : memref<1x1x128xf32, #tpu.memory_space<vmem>>, vector<1x1x128xf32>
    tpu.vector_store %arg5[%c0_17, %c0_18, %c0_19], %26 {strides = array<i32>} : memref<1x1x128xf32, #tpu.memory_space<vmem>>, vector<1x1x128xf32>,
    return
  }
  func.func @transform_0(%arg0: i32, %arg1: i32) -> (i32, i32) {
    %c1_i32 = arith.constant 1 : i32
    %0 = arith.muli %arg0, %c1_i32 : i32
    %1 = arith.addi %0, %arg1 : i32
    %c0_i32 = arith.constant 0 : i32
    %2 = arith.minsi %1, %c0_i32 : i32
    %c0_i32_0 = arith.constant 0 : i32
    %c0_i32_1 = arith.constant 0 : i32
    return %2, %c0_i32_0 : i32, i32
  }
  func.func @transform_1(%arg0: i32, %arg1: i32) -> (i32, i32) {
    %c1_i32 = arith.constant 1 : i32
    %0 = arith.muli %arg0, %c1_i32 : i32
    %1 = arith.addi %0, %arg1 : i32
    %c0_i32 = arith.constant 0 : i32
    %2 = arith.minsi %1, %c0_i32 : i32
    %c0_i32_0 = arith.constant 0 : i32
    %c0_i32_1 = arith.constant 0 : i32
    return %2, %c0_i32_0 : i32, i32
  }
  func.func @transform_2(%arg0: i32, %arg1: i32) -> (i32, i32, i32) {
    %c0_i32 = arith.constant 0 : i32
    %c0_i32_0 = arith.constant 0 : i32
    %c0_i32_1 = arith.constant 0 : i32
    return %arg0, %c0_i32, %c0_i32_0 : i32, i32, i32
  }
  func.func @transform_3(%arg0: i32, %arg1: i32) -> (i32, i32, i32) {
    %c0_i32 = arith.constant 0 : i32
    %c0_i32_0 = arith.constant 0 : i32
    %c0_i32_1 = arith.constant 0 : i32
    return %arg0, %c0_i32, %c0_i32_0 : i32, i32, i32
  }
}

</mosaic_0001>

<llo_original>
// kernel: tpu_custom_call.1
$region0: #{tpu_custom_call.1}
  #allocation0 [shape = 'u32[]', space=smem, size = 0x4, offset = 0x4, fixed_abs, tag = 'smem constant byte address 0x4 - core index']
  #allocation1 [shape = 'u32[144,128]{1,0:T(1,128)}', space=vmem, size = 0x12000, scoped, tag = 'internal scratch']
  %s0 = inlined_call_operand.hbm [shape: f32[16,128], index: 0, kind: input, shape index: {}]
  %s1 = inlined_call_operand.hbm [shape: f32[16,128], index: 1, kind: input, shape index: {}]
  %s2 = inlined_call_operand.hbm [shape: f32[1,1,128], index: 2, kind: output, shape index: {0}]
  %s3 = inlined_call_operand.hbm [shape: f32[1,1,128], index: 3, kind: output, shape index: {1}]
  %4 = xla_tuple %s2, %s3
  %s5 = sld [smem:[#allocation0]]
  $region38: #{tpu_custom_call.1} parent=0
    _
  %s7 = ssub.s32 1, %s5
  %s8 = scalar_select 0, %s7, %s5
  $region1: #{tpu_custom_call.1} parent=0
    #allocation2 [shape = 'u8[8192]{0}', space=vmem, size = 0x2000, scoped, tag = 'input window, operand 0, single buffered']
    #allocation3 [shape = 's32[1]{0}', space=sflag, size = 0x4, scoped, tag = 'scoped memory for tpu_custom_call.1']
    #allocation4 [shape = 's32[1]{0}', space=sflag, size = 0x4, scoped, tag = 'scoped memory for tpu_custom_call.1']
    #allocation5 [shape = 'u8[8192]{0}', space=vmem, size = 0x2000, scoped, tag = 'input window, operand 1, single buffered']
    #allocation6 [shape = 's32[1]{0}', space=sflag, size = 0x4, scoped, tag = 'scoped memory for tpu_custom_call.1']
    #allocation7 [shape = 'u8[512]{0}', space=vmem, size = 0x400, scoped, tag = 'output window, operand 0, single buffered']
    #allocation8 [shape = 'u8[512]{0}', space=vmem, size = 0x400, scoped, tag = 'output window, operand 1, single buffered']
    #allocation9 [shape = 's32[1]{0}', space=sflag, size = 0x4, scoped, tag = 'scoped memory for tpu_custom_call.1']
    %9 = vsyncpa [#allocation3], 0
    %10 = vsyncpa [#allocation6], 0
    %11 = vsyncpa [#allocation4], 0
    %12 = vsyncpa [#allocation9], 0
    // Predicated region
    $region2: #{tpu_custom_call.1} parent=1 // pred_check
      _
    $region3: #{tpu_custom_call.1} parent=1 // pred_check_branch
      %14 = sbr.rel (0) target = $region5
    $region4: #{tpu_custom_call.1} parent=1 // pred_region
      %s15 = sadd.s32 0, 0
      %p16 = scmp.lt.s32.totalorder %s15, 0
      %s17 = scalar_select %p16, %s15, 0
      %s18 = smul.u32 2, %s17
      %s20 = ssub.s32 256, 256
      %21 = vsyncadd [#allocation3], %s20
      %s22 = smul.addr %s18, 128
      %s23 = scalar_lea.hbm %s0, %s22
      %s24 = sshll.u32 [#allocation2], 4
      %s25 = int_to_ptr.vmem [resolvable:$true] %s24
      %30 = dma.hbm_to_vmem [thread:$0]  %s23, 256, %s25, [#allocation3], 128, 128, 8
    $region5: #{tpu_custom_call.1} parent=1 // pred_fallthru
      _
    // Predicated region
    $region6: #{tpu_custom_call.1} parent=1 // pred_check
      _
    $region7: #{tpu_custom_call.1} parent=1 // pred_check_branch
      %32 = sbr.rel (0) target = $region9
    $region8: #{tpu_custom_call.1} parent=1 // pred_region
      %s33 = sadd.s32 0, 0
      %p34 = scmp.lt.s32.totalorder %s33, 0
      %s35 = scalar_select %p34, %s33, 0
      %s36 = smul.u32 2, %s35
      %s38 = ssub.s32 256, 256
      %39 = vsyncadd [#allocation6], %s38
      %s40 = smul.addr %s36, 128
      %s41 = scalar_lea.hbm %s1, %s40
      %s42 = sshll.u32 [#allocation5], 4
      %s43 = int_to_ptr.vmem [resolvable:$true] %s42
      %48 = dma.hbm_to_vmem [thread:$0]  %s41, 256, %s43, [#allocation6], 128, 128, 8
    $region9: #{tpu_custom_call.1} parent=1 // pred_fallthru
      _
    // Predicated region
    $region10: #{tpu_custom_call.1} parent=1 // pred_check
      _
    $region11: #{tpu_custom_call.1} parent=1 // pred_check_branch
      %50 = sbr.rel (0) target = $region13
    $region12: #{tpu_custom_call.1} parent=1 // pred_region
      %51 = dma.done [#allocation3], 256
    $region13: #{tpu_custom_call.1} parent=1 // pred_fallthru
      _
    // Predicated region
    $region14: #{tpu_custom_call.1} parent=1 // pred_check
      _
    $region15: #{tpu_custom_call.1} parent=1 // pred_check_branch
      %53 = sbr.rel (0) target = $region17
    $region16: #{tpu_custom_call.1} parent=1 // pred_region
      %54 = dma.done [#allocation6], 256
    $region17: #{tpu_custom_call.1} parent=1 // pred_fallthru
      _
    %s55 = sadd.s32 0, 0
    %p56 = scmp.lt.s32.totalorder %s55, 0
    %s57 = scalar_select %p56, %s55, 0
    %s58 = smul.u32 2, %s57
    %s59 = sadd.s32 0, 0
    %p60 = scmp.lt.s32.totalorder %s59, 0
    %s61 = scalar_select %p60, %s59, 0
    %s62 = smul.u32 2, %s61
    %p63 = scmp.eq.s32.totalorder 0, 0
    // Predicated region
    $region18: #{tpu_custom_call.1} parent=1 // pred_check
      %p64 = pneg %p63
    $region19: #{tpu_custom_call.1} parent=1 // pred_check_branch
      %66 = sbr.rel (%p64) target = $region21
    $region20: #{tpu_custom_call.1} parent=1 // pred_region
      %67 = vst [vmem:[#allocation7] sm:$0x1] 0.0
      %68 = vst [vmem:[#allocation8] sm:$0x1] 0.0
    $region21: #{tpu_custom_call.1} parent=1 // pred_fallthru
      _
    %v69 = vld [vmem:[#allocation2] sm:$0xff]
    %v70 = vld [vmem:[#allocation2 + $0x8] sm:$0xff]
    %v71 = vld [vmem:[#allocation5] sm:$0xff]
    %v72 = vld [vmem:[#allocation5 + $0x8] sm:$0xff]
    %vm73 = vcmp.ne.f32.partialorder %v71, %v71
    %vm74 = vcmp.ne.f32.partialorder %v72, %v72
    %vm75 = vmxor %vm73, 1
    %vm76 = vmxor %vm74, 1
    %v77 = vsub.f32 %v69, %v71
    %v78 = vsub.f32 %v70, %v72
    %v79 = vand.u32 2147483647, %v77
    %v80 = vand.u32 2147483647, %v78
    %vm81 = vcmp.ne.f32.partialorder %v79, %v79
    %vm82 = vcmp.ne.f32.partialorder %v80, %v80
    %vm83 = vmxor %vm81, 1
    %vm84 = vmxor %vm82, 1
    %vm85 = vmand %vm75, %vm83
    %vm86 = vmand %vm76, %vm84
    %v87 = vsel %vm85, %v79, 0.0
    %v88 = vsel %vm86, %v80, 0.0
    %v89 = vld [vmem:[#allocation7] sm:$0x1]
    %v90 = vadd.f32 %v87, %v88
    %v91 = vrot.slane %v90, 4
    %v92 = vadd.f32 %v90, %v91
    %v93 = vrot.slane %v92, 2
    %v94 = vadd.f32 %v92, %v93
    %v95 = vrot.slane %v94, 1
    %v96 = vadd.f32 %v94, %v95
    %v97 = vadd.f32 %v89, %v96
    %98 = vst [vmem:[#allocation7] sm:$0x1] %v97
    %v99 = vld [vmem:[#allocation8] sm:$0x1]
    %v100 = vsel %vm75, 1, 0
    %v101 = vsel %vm76, 1, 0
    %v102 = vcvt.s32.f32 %v100
    %v103 = vcvt.s32.f32 %v101
    %v104 = vadd.f32 %v102, %v103
    %v105 = vrot.slane %v104, 4
    %v106 = vadd.f32 %v104, %v105
    %v107 = vrot.slane %v106, 2
    %v108 = vadd.f32 %v106, %v107
    %v109 = vrot.slane %v108, 1
    %v110 = vadd.f32 %v108, %v109
    %v111 = vadd.f32 %v99, %v110
    %112 = vst [vmem:[#allocation8] sm:$0x1] %v111
    // Predicated region
    $region22: #{tpu_custom_call.1} parent=1 // pred_check
      _
    $region23: #{tpu_custom_call.1} parent=1 // pred_check_branch
      %114 = sbr.rel (0) target = $region25
    $region24: #{tpu_custom_call.1} parent=1 // pred_region
      %s116 = ssub.s32 16, 16
      %117 = vsyncadd [#allocation4], %s116
      %s119 = sshll.u32 [#allocation7], 4
      %s120 = int_to_ptr.vmem [resolvable:$true] %s119
      %122 = dma.vmem_to_hbm [thread:$0]  %s120, 16, %s2, [#allocation4]
    $region25: #{tpu_custom_call.1} parent=1 // pred_fallthru
      _
    // Predicated region
    $region26: #{tpu_custom_call.1} parent=1 // pred_check
      _
    $region27: #{tpu_custom_call.1} parent=1 // pred_check_branch
      %124 = sbr.rel (0) target = $region29
    $region28: #{tpu_custom_call.1} parent=1 // pred_region
      %s126 = ssub.s32 16, 16
      %127 = vsyncadd [#allocation9], %s126
      %s129 = sshll.u32 [#allocation8], 4
      %s130 = int_to_ptr.vmem [resolvable:$true] %s129
      %132 = dma.vmem_to_hbm [thread:$0]  %s130, 16, %s3, [#allocation9]
    $region29: #{tpu_custom_call.1} parent=1 // pred_fallthru
      _
    // Predicated region
    $region30: #{tpu_custom_call.1} parent=1 // pred_check
      _
    $region31: #{tpu_custom_call.1} parent=1 // pred_check_branch
      %134 = sbr.rel (0) target = $region33
    $region32: #{tpu_custom_call.1} parent=1 // pred_region
      %135 = dma.done [#allocation4], 16
    $region33: #{tpu_custom_call.1} parent=1 // pred_fallthru
      _
    // Predicated region
    $region34: #{tpu_custom_call.1} parent=1 // pred_check
      _
    $region35: #{tpu_custom_call.1} parent=1 // pred_check_branch
      %137 = sbr.rel (0) target = $region37
    $region36: #{tpu_custom_call.1} parent=1 // pred_region
      %138 = dma.done [#allocation9], 16
    $region37: #{tpu_custom_call.1} parent=1 // pred_fallthru
      _
    %139 = vsyncpa [#allocation3], 1
    %140 = vsyncpa [#allocation6], 1
    %141 = vsyncpa [#allocation4], 1
    %142 = vsyncpa [#allocation9], 1

</llo_original>
